<compile_context>
chip_gen: v5e
topology: v5e:2x2
jax: 0.10.0
libtpu: 0.0.40
codegen_flags: <defaults>
</compile_context>

<pallas_src>
import functools

import jax
import jax.numpy as jnp
from jax import lax
from jax.experimental import pallas as pl
from jax.experimental.pallas import tpu as pltpu

EPS = 1e-5


def _residual_block_kernel(x_ref, w1_ref, w2_ref, dsh_ref, g_ref, rows_ref,
                           out_ref, *, inv_count):
    """All operands are lane-dense 2-D (or stacked 2-D) views.

    x_ref   : (R, L) = (N*H, W*C)   input activations (NHWC flattened)
    w1_ref  : (3, L, L)             banded conv1 weights, one matrix per ky
    w2_ref  : (3, L, L)             banded conv2 weights
    dsh_ref : (2, R, R)             row-shift mats: [0] picks r-1, [1] picks r+1
                                    (zero at image boundaries == zero y-pad)
    g_ref   : (L, L)                per-channel group-sum matrix for BN stats
    rows_ref: (6, 1, L)             tiled per-lane rows: b1, g1, be1, b2, g2, be2
    out_ref : (R, L)                output
    """
    x2d = x_ref[...]
    g_mat = g_ref[...]
    d_dn = dsh_ref[0]                       # (R, R): selects row r-1 (same image)
    d_up = dsh_ref[1]                       # (R, R): selects row r+1 (same image)

    def conv3x3(a, w_ref, bias_row):
        # Vertical taps via tiny row-shift matmuls (zero y-pad baked in);
        # horizontal taps + channel mixing via block-banded (L, L) matrices,
        # giving full-depth MXU contractions and a lane-dense result.
        a_dn = jnp.dot(d_dn, a, preferred_element_type=jnp.float32)      # a[r-1]
        a_up = jnp.dot(d_up, a, preferred_element_type=jnp.float32)      # a[r+1]
        acc = jnp.dot(a_dn, w_ref[0], preferred_element_type=jnp.float32)        # ky=0
        acc = acc + jnp.dot(a, w_ref[1], preferred_element_type=jnp.float32)     # ky=1
        acc = acc + jnp.dot(a_up, w_ref[2], preferred_element_type=jnp.float32)  # ky=2
        return acc + bias_row

    def batchnorm(a, gamma_row, beta_row):
        # Single pass over `a`: per-lane sum / sum-of-squares, then one small
        # matmul against the group matrix so each lane holds its channel's
        # global statistics.  Biased variance (training-mode BatchNorm2d).
        s1 = jnp.sum(a, axis=0, keepdims=True)                 # (1, L)
        s2 = jnp.sum(a * a, axis=0, keepdims=True)             # (1, L)
        stats = jnp.concatenate([s1, s2], axis=0)              # (2, L), one MXU push
        grp = jnp.dot(stats, g_mat, preferred_element_type=jnp.float32) * inv_count
        mean = grp[0:1, :]                                     # (1, L)
        var = grp[1:2, :] - mean * mean                        # (1, L)
        return (a - mean) * lax.rsqrt(var + EPS) * gamma_row + beta_row

    h = conv3x3(x2d, w1_ref, rows_ref[0])
    h = jnp.maximum(batchnorm(h, rows_ref[1], rows_ref[2]), 0.0)
    h = conv3x3(h, w2_ref, rows_ref[3])
    h = batchnorm(h, rows_ref[4], rows_ref[5])
    out_ref[...] = jnp.maximum(h + x2d, 0.0)                   # lane-dense store


def _band_weights(w_oihw, width):
    """(Cout, Cin, 3, 3) OIHW conv weights -> (3, W*Cin, W*Cout) banded mats.

    mats[ky][x_in*Cin + ci, x_out*Cout + co] = w[co, ci, ky, x_in - x_out + 1]
    for |x_in - x_out| <= 1, else 0 (== zero padding along x).
    """
    mats = []
    for ky in range(3):
        m = None
        for kx in range(3):
            dx = kx - 1
            blk = jnp.transpose(w_oihw[:, :, ky, kx], (1, 0)).astype(jnp.float32)
            band = jnp.kron(jnp.eye(width, k=-dx, dtype=jnp.float32), blk)
            m = band if m is None else m + band
        mats.append(m)
    return jnp.stack(mats)


def _row_shift_mats(n, h):
    """(2, N*H, N*H): [0] selects row r-1, [1] selects row r+1 (same image only)."""
    eye_n = jnp.eye(n, dtype=jnp.float32)
    d_dn = jnp.kron(eye_n, jnp.eye(h, k=-1, dtype=jnp.float32))
    d_up = jnp.kron(eye_n, jnp.eye(h, k=1, dtype=jnp.float32))
    return jnp.stack([d_dn, d_up])


def residual_block(x_nchw, params):
    """x_nchw: (N, C, H, W) float32 — same convention as the PyTorch module."""
    x = jnp.transpose(x_nchw, (0, 2, 3, 1)).astype(jnp.float32)   # NCHW -> NHWC
    n, h, w, c = x.shape
    rdim, ldim = n * h, w * c
    x2d = x.reshape(rdim, ldim)                                   # lane-dense view

    w1b = _band_weights(params["w1"], w)                          # (3, L, L)
    w2b = _band_weights(params["w2"], w)                          # (3, L, L)
    dsh = _row_shift_mats(n, h)                                   # (2, R, R)
    g_mat = jnp.kron(jnp.ones((w, w), jnp.float32),
                     jnp.eye(c, dtype=jnp.float32))               # (L, L)

    tile_row = lambda v: jnp.tile(v.astype(jnp.float32), w)       # lane x*C+c -> v[c]
    rows = jnp.stack([tile_row(params["b1"]), tile_row(params["g1"]),
                      tile_row(params["be1"]), tile_row(params["b2"]),
                      tile_row(params["g2"]), tile_row(params["be2"])])
    rows = rows.reshape(6, 1, ldim)

    kernel = functools.partial(_residual_block_kernel,
                               inv_count=1.0 / float(n * h * w))

    out2d = pl.pallas_call(
        kernel,
        out_shape=jax.ShapeDtypeStruct((rdim, ldim), jnp.float32),
        in_specs=[pl.BlockSpec(memory_space=pltpu.MemorySpace.VMEM)] * 6,
        out_specs=pl.BlockSpec(memory_space=pltpu.MemorySpace.VMEM),
    )(x2d, w1b, w2b, dsh, g_mat, rows)

    return jnp.transpose(out2d.reshape(n, h, w, c), (0, 3, 1, 2))  # NHWC -> NCHW


def _reference_forward(x, params):
    """Pure-JAX NCHW reference mirroring the PyTorch module (training-mode BN)."""
    def conv(h, w, b):
        y = lax.conv_general_dilated(
            h, w, window_strides=(1, 1), padding=((1, 1), (1, 1)),
            dimension_numbers=("NCHW", "OIHW", "NCHW"))
        return y + b[None, :, None, None]

    def bn(h, g, be):
        mean = jnp.mean(h, axis=(0, 2, 3), keepdims=True)
        var = jnp.mean((h - mean) ** 2, axis=(0, 2, 3), keepdims=True)
        return (h - mean) / jnp.sqrt(var + EPS) * g[None, :, None, None] \
            + be[None, :, None, None]

    out = jax.nn.relu(bn(conv(x, params["w1"], params["b1"]),
                         params["g1"], params["be1"]))
    out = bn(conv(out, params["w2"], params["b2"]), params["g2"], params["be2"])
    return jax.nn.relu(out + x)


if __name__ == "__main__":
    N, C, H, W = 2, 8, 16, 16          # in_channels == out_channels (residual add)
    key = jax.random.PRNGKey(0)
    kx, k1, k2, k3, k4 = jax.random.split(key, 5)

    x = jax.random.normal(kx, (N, C, H, W), jnp.float32)
    params = {
        "w1": 0.1 * jax.random.normal(k1, (C, C, 3, 3), jnp.float32),   # OIHW
        "b1": 0.05 * jax.random.normal(k2, (C,), jnp.float32),
        "g1": jnp.ones((C,), jnp.float32) * 1.1,
        "be1": jnp.full((C,), 0.02, jnp.float32),
        "w2": 0.1 * jax.random.normal(k3, (C, C, 3, 3), jnp.float32),
        "b2": 0.05 * jax.random.normal(k4, (C,), jnp.float32),
        "g2": jnp.ones((C,), jnp.float32) * 0.9,
        "be2": jnp.full((C,), -0.01, jnp.float32),
    }

    out = jax.block_until_ready(residual_block(x, params))
    ref = jax.block_until_ready(_reference_forward(x, params))

    assert out.shape == (N, C, H, W)
    assert jnp.max(jnp.abs(out - ref)) < 5e-4, "mismatch vs reference"
    print("KERNEL_OK")
</pallas_src>

<mosaic_0001>
module attributes {stable_mosaic.version = 11 : i64} {
  func.func @_residual_block_kernel(%arg0: memref<32x128xf32, #tpu.memory_space<vmem>>, %arg1: memref<3x128x128xf32, #tpu.memory_space<vmem>>, %arg2: memref<3x128x128xf32, #tpu.memory_space<vmem>>, %arg3: memref<2x32x32xf32, #tpu.memory_space<vmem>>, %arg4: memref<128x128xf32, #tpu.memory_space<vmem>>, %arg5: memref<6x1x128xf32, #tpu.memory_space<vmem>>, %arg6: memref<32x128xf32, #tpu.memory_space<vmem>>) attributes {dimension_semantics = [], scalar_prefetch = 0 : i64, scratch_operands = 0 : i64, tpu.core_type = #tpu.core_type<tc>} {
    %c0 = arith.constant 0 : index
    %c0_0 = arith.constant 0 : index
    %0 = vector.load %arg0[%c0, %c0_0] : memref<32x128xf32, #tpu.memory_space<vmem>>, vector<32x128xf32>
    %c0_1 = arith.constant 0 : index
    %c0_2 = arith.constant 0 : index
    %1 = vector.load %arg4[%c0_1, %c0_2] : memref<128x128xf32, #tpu.memory_space<vmem>>, vector<128x128xf32>
    %c0_3 = arith.constant 0 : index
    %c0_4 = arith.constant 0 : index
    %c0_5 = arith.constant 0 : index
    %2 = vector.load %arg3[%c0_3, %c0_4, %c0_5] : memref<2x32x32xf32, #tpu.memory_space<vmem>>, vector<1x32x32xf32>
    %3 = vector.shape_cast %2 : vector<1x32x32xf32> to vector<32x32xf32>
    %c1 = arith.constant 1 : index
    %c0_6 = arith.constant 0 : index
    %c0_7 = arith.constant 0 : index
    %4 = vector.load %arg3[%c1, %c0_6, %c0_7] : memref<2x32x32xf32, #tpu.memory_space<vmem>>, vector<1x32x32xf32>
    %5 = vector.shape_cast %4 : vector<1x32x32xf32> to vector<32x32xf32>
    %c0_8 = arith.constant 0 : index
    %c0_9 = arith.constant 0 : index
    %c0_10 = arith.constant 0 : index
    %6 = vector.load %arg5[%c0_8, %c0_9, %c0_10] : memref<6x1x128xf32, #tpu.memory_space<vmem>>, vector<1x1x128xf32>
    %7 = vector.shape_cast %6 : vector<1x1x128xf32> to vector<1x128xf32>
    %cst = arith.constant dense<0.000000e+00> : vector<32x128xf32>
    %8 = tpu.matmul %3, %0, %cst {dimension_numbers = #tpu.dot_dimension_numbers<[1], [0], [0], [1], [0, 0, 1, 1], [], []>} : vector<32x32xf32>, vector<32x128xf32>, vector<32x128xf32> -> vector<32x128xf32>
    %cst_11 = arith.constant dense<0.000000e+00> : vector<32x128xf32>
    %9 = tpu.matmul %5, %0, %cst_11 {dimension_numbers = #tpu.dot_dimension_numbers<[1], [0], [0], [1], [0, 0, 1, 1], [], []>} : vector<32x32xf32>, vector<32x128xf32>, vector<32x128xf32> -> vector<32x128xf32>
    %c0_12 = arith.constant 0 : index
    %c0_13 = arith.constant 0 : index
    %c0_14 = arith.constant 0 : index
    %10 = vector.load %arg1[%c0_12, %c0_13, %c0_14] : memref<3x128x128xf32, #tpu.memory_space<vmem>>, vector<1x128x128xf32>
    %11 = vector.shape_cast %10 : vector<1x128x128xf32> to vector<128x128xf32>
    %cst_15 = arith.constant dense<0.000000e+00> : vector<32x128xf32>
    %12 = tpu.matmul %8, %11, %cst_15 {dimension_numbers = #tpu.dot_dimension_numbers<[1], [0], [0], [1], [0, 0, 1, 1], [], []>} : vector<32x128xf32>, vector<128x128xf32>, vector<32x128xf32> -> vector<32x128xf32>
    %c1_16 = arith.constant 1 : index
    %c0_17 = arith.constant 0 : index
    %c0_18 = arith.constant 0 : index
    %13 = vector.load %arg1[%c1_16, %c0_17, %c0_18] : memref<3x128x128xf32, #tpu.memory_space<vmem>>, vector<1x128x128xf32>
    %14 = vector.shape_cast %13 : vector<1x128x128xf32> to vector<128x128xf32>
    %cst_19 = arith.constant dense<0.000000e+00> : vector<32x128xf32>
    %15 = tpu.matmul %0, %14, %cst_19 {dimension_numbers = #tpu.dot_dimension_numbers<[1], [0], [0], [1], [0, 0, 1, 1], [], []>} : vector<32x128xf32>, vector<128x128xf32>, vector<32x128xf32> -> vector<32x128xf32>
    %16 = arith.addf %12, %15 : vector<32x128xf32>
    %c2 = arith.constant 2 : index
    %c0_20 = arith.constant 0 : index
    %c0_21 = arith.constant 0 : index
    %17 = vector.load %arg1[%c2, %c0_20, %c0_21] : memref<3x128x128xf32, #tpu.memory_space<vmem>>, vector<1x128x128xf32>
    %18 = vector.shape_cast %17 : vector<1x128x128xf32> to vector<128x128xf32>
    %cst_22 = arith.constant dense<0.000000e+00> : vector<32x128xf32>
    %19 = tpu.matmul %9, %18, %cst_22 {dimension_numbers = #tpu.dot_dimension_numbers<[1], [0], [0], [1], [0, 0, 1, 1], [], []>} : vector<32x128xf32>, vector<128x128xf32>, vector<32x128xf32> -> vector<32x128xf32>
    %20 = arith.addf %16, %19 : vector<32x128xf32>
    %21 = vector.broadcast %7 : vector<1x128xf32> to vector<32x128xf32>
    %22 = arith.addf %20, %21 : vector<32x128xf32>
    %c1_23 = arith.constant 1 : index
    %c0_24 = arith.constant 0 : index
    %c0_25 = arith.constant 0 : index
    %23 = vector.load %arg5[%c1_23, %c0_24, %c0_25] : memref<6x1x128xf32, #tpu.memory_space<vmem>>, vector<1x1x128xf32>
    %24 = vector.shape_cast %23 : vector<1x1x128xf32> to vector<1x128xf32>
    %c2_26 = arith.constant 2 : index
    %c0_27 = arith.constant 0 : index
    %c0_28 = arith.constant 0 : index
    %25 = vector.load %arg5[%c2_26, %c0_27, %c0_28] : memref<6x1x128xf32, #tpu.memory_space<vmem>>, vector<1x1x128xf32>
    %26 = vector.shape_cast %25 : vector<1x1x128xf32> to vector<1x128xf32>
    %cst_29 = arith.constant dense<0.000000e+00> : vector<128xf32>
    %27 = vector.multi_reduction <add>, %22, %cst_29 [0] : vector<32x128xf32> to vector<128xf32>
    %28 = vector.shape_cast %27 : vector<128xf32> to vector<1x128xf32>
    %29 = arith.mulf %22, %22 : vector<32x128xf32>
    %cst_30 = arith.constant dense<0.000000e+00> : vector<128xf32>
    %30 = vector.multi_reduction <add>, %29, %cst_30 [0] : vector<32x128xf32> to vector<128xf32>
    %31 = vector.shape_cast %30 : vector<128xf32> to vector<1x128xf32>
    %32 = tpu.concatenate %28, %31 in 0 : vector<1x128xf32>, vector<1x128xf32> -> vector<2x128xf32>
    %cst_31 = arith.constant dense<0.000000e+00> : vector<2x128xf32>
    %33 = tpu.matmul %32, %1, %cst_31 {dimension_numbers = #tpu.dot_dimension_numbers<[1], [0], [0], [1], [0, 0, 1, 1], [], []>} : vector<2x128xf32>, vector<128x128xf32>, vector<2x128xf32> -> vector<2x128xf32>
    %cst_32 = arith.constant 0.001953125 : f32
    %34 = vector.broadcast %cst_32 : f32 to vector<2x128xf32>
    %35 = arith.mulf %33, %34 : vector<2x128xf32>
    %36 = vector.extract_strided_slice %35 {offsets = [0, 0], sizes = [1, 128], strides = [1, 1]} : vector<2x128xf32> to vector<1x128xf32>
    %37 = vector.extract_strided_slice %35 {offsets = [1, 0], sizes = [1, 128], strides = [1, 1]} : vector<2x128xf32> to vector<1x128xf32>
    %38 = arith.mulf %36, %36 : vector<1x128xf32>
    %39 = arith.subf %37, %38 : vector<1x128xf32>
    %40 = vector.broadcast %36 : vector<1x128xf32> to vector<32x128xf32>
    %41 = arith.subf %22, %40 : vector<32x128xf32>
    %cst_33 = arith.constant 9.99999974E-6 : f32
    %42 = vector.broadcast %cst_33 : f32 to vector<1x128xf32>
    %43 = arith.addf %39, %42 : vector<1x128xf32>
    %44 = math.rsqrt %43 : vector<1x128xf32>
    %45 = vector.broadcast %44 : vector<1x128xf32> to vector<32x128xf32>
    %46 = arith.mulf %41, %45 : vector<32x128xf32>
    %47 = vector.broadcast %24 : vector<1x128xf32> to vector<32x128xf32>
    %48 = arith.mulf %46, %47 : vector<32x128xf32>
    %49 = vector.broadcast %26 : vector<1x128xf32> to vector<32x128xf32>
    %50 = arith.addf %48, %49 : vector<32x128xf32>
    %cst_34 = arith.constant 0.000000e+00 : f32
    %51 = vector.broadcast %cst_34 : f32 to vector<32x128xf32>
    %52 = arith.maximumf %50, %51 : vector<32x128xf32>
    %c3 = arith.constant 3 : index
    %c0_35 = arith.constant 0 : index
    %c0_36 = arith.constant 0 : index
    %53 = vector.load %arg5[%c3, %c0_35, %c0_36] : memref<6x1x128xf32, #tpu.memory_space<vmem>>, vector<1x1x128xf32>
    %54 = vector.shape_cast %53 : vector<1x1x128xf32> to vector<1x128xf32>
    %cst_37 = arith.constant dense<0.000000e+00> : vector<32x128xf32>
    %55 = tpu.matmul %3, %52, %cst_37 {dimension_numbers = #tpu.dot_dimension_numbers<[1], [0], [0], [1], [0, 0, 1, 1], [], []>} : vector<32x32xf32>, vector<32x128xf32>, vector<32x128xf32> -> vector<32x128xf32>
    %cst_38 = arith.constant dense<0.000000e+00> : vector<32x128xf32>
    %56 = tpu.matmul %5, %52, %cst_38 {dimension_numbers = #tpu.dot_dimension_numbers<[1], [0], [0], [1], [0, 0, 1, 1], [], []>} : vector<32x32xf32>, vector<32x128xf32>, vector<32x128xf32> -> vector<32x128xf32>
    %c0_39 = arith.constant 0 : index
    %c0_40 = arith.constant 0 : index
    %c0_41 = arith.constant 0 : index
    %57 = vector.load %arg2[%c0_39, %c0_40, %c0_41] : memref<3x128x128xf32, #tpu.memory_space<vmem>>, vector<1x128x128xf32>
    %58 = vector.shape_cast %57 : vector<1x128x128xf32> to vector<128x128xf32>
    %cst_42 = arith.constant dense<0.000000e+00> : vector<32x128xf32>
    %59 = tpu.matmul %55, %58, %cst_42 {dimension_numbers = #tpu.dot_dimension_numbers<[1], [0], [0], [1], [0, 0, 1, 1], [], []>} : vector<32x128xf32>, vector<128x128xf32>, vector<32x128xf32> -> vector<32x128xf32>
    %c1_43 = arith.constant 1 : index
    %c0_44 = arith.constant 0 : index
    %c0_45 = arith.constant 0 : index
    %60 = vector.load %arg2[%c1_43, %c0_44, %c0_45] : memref<3x128x128xf32, #tpu.memory_space<vmem>>, vector<1x128x128xf32>
    %61 = vector.shape_cast %60 : vector<1x128x128xf32> to vector<128x128xf32>
    %cst_46 = arith.constant dense<0.000000e+00> : vector<32x128xf32>
    %62 = tpu.matmul %52, %61, %cst_46 {dimension_numbers = #tpu.dot_dimension_numbers<[1], [0], [0], [1], [0, 0, 1, 1], [], []>} : vector<32x128xf32>, vector<128x128xf32>, vector<32x128xf32> -> vector<32x128xf32>
    %63 = arith.addf %59, %62 : vector<32x128xf32>
    %c2_47 = arith.constant 2 : index
    %c0_48 = arith.constant 0 : index
    %c0_49 = arith.constant 0 : index
    %64 = vector.load %arg2[%c2_47, %c0_48, %c0_49] : memref<3x128x128xf32, #tpu.memory_space<vmem>>, vector<1x128x128xf32>
    %65 = vector.shape_cast %64 : vector<1x128x128xf32> to vector<128x128xf32>
    %cst_50 = arith.constant dense<0.000000e+00> : vector<32x128xf32>
    %66 = tpu.matmul %56, %65, %cst_50 {dimension_numbers = #tpu.dot_dimension_numbers<[1], [0], [0], [1], [0, 0, 1, 1], [], []>} : vector<32x128xf32>, vector<128x128xf32>, vector<32x128xf32> -> vector<32x128xf32>
    %67 = arith.addf %63, %66 : vector<32x128xf32>
    %68 = vector.broadcast %54 : vector<1x128xf32> to vector<32x128xf32>
    %69 = arith.addf %67, %68 : vector<32x128xf32>
    %c4 = arith.constant 4 : index
    %c0_51 = arith.constant 0 : index
    %c0_52 = arith.constant 0 : index
    %70 = vector.load %arg5[%c4, %c0_51, %c0_52] : memref<6x1x128xf32, #tpu.memory_space<vmem>>, vector<1x1x128xf32>
    %71 = vector.shape_cast %70 : vector<1x1x128xf32> to vector<1x128xf32>
    %c5 = arith.constant 5 : index
    %c0_53 = arith.constant 0 : index
    %c0_54 = arith.constant 0 : index
    %72 = vector.load %arg5[%c5, %c0_53, %c0_54] : memref<6x1x128xf32, #tpu.memory_space<vmem>>, vector<1x1x128xf32>
    %73 = vector.shape_cast %72 : vector<1x1x128xf32> to vector<1x128xf32>
    %cst_55 = arith.constant dense<0.000000e+00> : vector<128xf32>
    %74 = vector.multi_reduction <add>, %69, %cst_55 [0] : vector<32x128xf32> to vector<128xf32>
    %75 = vector.shape_cast %74 : vector<128xf32> to vector<1x128xf32>
    %76 = arith.mulf %69, %69 : vector<32x128xf32>
    %cst_56 = arith.constant dense<0.000000e+00> : vector<128xf32>
    %77 = vector.multi_reduction <add>, %76, %cst_56 [0] : vector<32x128xf32> to vector<128xf32>
    %78 = vector.shape_cast %77 : vector<128xf32> to vector<1x128xf32>
    %79 = tpu.concatenate %75, %78 in 0 : vector<1x128xf32>, vector<1x128xf32> -> vector<2x128xf32>
    %cst_57 = arith.constant dense<0.000000e+00> : vector<2x128xf32>
    %80 = tpu.matmul %79, %1, %cst_57 {dimension_numbers = #tpu.dot_dimension_numbers<[1], [0], [0], [1], [0, 0, 1, 1], [], []>} : vector<2x128xf32>, vector<128x128xf32>, vector<2x128xf32> -> vector<2x128xf32>
    %cst_58 = arith.constant 0.001953125 : f32
    %81 = vector.broadcast %cst_58 : f32 to vector<2x128xf32>
    %82 = arith.mulf %80, %81 : vector<2x128xf32>
    %83 = vector.extract_strided_slice %82 {offsets = [0, 0], sizes = [1, 128], strides = [1, 1]} : vector<2x128xf32> to vector<1x128xf32>
    %84 = vector.extract_strided_slice %82 {offsets = [1, 0], sizes = [1, 128], strides = [1, 1]} : vector<2x128xf32> to vector<1x128xf32>
    %85 = arith.mulf %83, %83 : vector<1x128xf32>
    %86 = arith.subf %84, %85 : vector<1x128xf32>
    %87 = vector.broadcast %83 : vector<1x128xf32> to vector<32x128xf32>
    %88 = arith.subf %69, %87 : vector<32x128xf32>
    %cst_59 = arith.constant 9.99999974E-6 : f32
    %89 = vector.broadcast %cst_59 : f32 to vector<1x128xf32>
    %90 = arith.addf %86, %89 : vector<1x128xf32>
    %91 = math.rsqrt %90 : vector<1x128xf32>
    %92 = vector.broadcast %91 : vector<1x128xf32> to vector<32x128xf32>
    %93 = arith.mulf %88, %92 : vector<32x128xf32>
    %94 = vector.broadcast %71 : vector<1x128xf32> to vector<32x128xf32>
    %95 = arith.mulf %93, %94 : vector<32x128xf32>
    %96 = vector.broadcast %73 : vector<1x128xf32> to vector<32x128xf32>
    %97 = arith.addf %95, %96 : vector<32x128xf32>
    %98 = arith.addf %97, %0 : vector<32x128xf32>
    %cst_60 = arith.constant 0.000000e+00 : f32
    %99 = vector.broadcast %cst_60 : f32 to vector<32x128xf32>
    %100 = arith.maximumf %98, %99 : vector<32x128xf32>
    %c0_61 = arith.constant 0 : index
    %c0_62 = arith.constant 0 : index
    %101 = vector.load %arg6[%c0_61, %c0_62] : memref<32x128xf32, #tpu.memory_space<vmem>>, vector<32x128xf32>
    tpu.vector_store %arg6[%c0_61, %c0_62], %100 {strides = array<i32>} : memref<32x128xf32, #tpu.memory_space<vmem>>, vector<32x128xf32>,
    return
  }
}

</mosaic_0001>

<llo_original>
// kernel: tpu_custom_call.1
$region0: #{tpu_custom_call.1}
  #allocation0 [shape = 'u32[]', space=smem, size = 0x4, offset = 0x4, fixed_abs, tag = 'smem constant byte address 0x4 - core index']
  #allocation1 [shape = 'u32[72,128]{1,0:T(1,128)}', space=vmem, size = 0x9000, scoped, tag = 'internal scratch']
  %s0 = inlined_call_operand.hbm [shape: f32[32,128], index: 0, kind: input, shape index: {}]
  %s1 = inlined_call_operand.hbm [shape: f32[3,128,128], index: 1, kind: input, shape index: {}]
  %s2 = inlined_call_operand.hbm [shape: f32[3,128,128], index: 2, kind: input, shape index: {}]
  %s3 = inlined_call_operand.hbm [shape: f32[2,32,32], index: 3, kind: input, shape index: {}]
  %s4 = inlined_call_operand.hbm [shape: f32[128,128], index: 4, kind: input, shape index: {}]
  %s5 = inlined_call_operand.hbm [shape: f32[6,1,128], index: 5, kind: input, shape index: {}]
  %s6 = inlined_call_operand.hbm [shape: f32[32,128], index: 6, kind: output, shape index: {}]
  %s7 = sld [smem:[#allocation0]]
  $region58: #{tpu_custom_call.1} parent=0
    _
  %s9 = ssub.s32 1, %s7
  %s10 = scalar_select 0, %s9, %s7
  $region1: #{tpu_custom_call.1} parent=0
    #allocation2 [shape = 'u8[16384]{0}', space=vmem, size = 0x4000, scoped, tag = 'input window, operand 0, single buffered']
    #allocation3 [shape = 's32[1]{0}', space=sflag, size = 0x4, scoped, tag = 'scoped memory for tpu_custom_call.1']
    #allocation4 [shape = 's32[1]{0}', space=sflag, size = 0x4, scoped, tag = 'scoped memory for tpu_custom_call.1']
    #allocation5 [shape = 'u8[196608]{0}', space=vmem, size = 0x30000, scoped, tag = 'input window, operand 1, single buffered']
    #allocation6 [shape = 's32[1]{0}', space=sflag, size = 0x4, scoped, tag = 'scoped memory for tpu_custom_call.1']
    #allocation7 [shape = 'u8[196608]{0}', space=vmem, size = 0x30000, scoped, tag = 'input window, operand 2, single buffered']
    #allocation8 [shape = 'u8[32768]{0}', space=vmem, size = 0x8000, scoped, tag = 'input window, operand 3, single buffered']
    #allocation9 [shape = 's32[1]{0}', space=sflag, size = 0x4, scoped, tag = 'scoped memory for tpu_custom_call.1']
    #allocation10 [shape = 'u8[65536]{0}', space=vmem, size = 0x10000, scoped, tag = 'input window, operand 4, single buffered']
    #allocation11 [shape = 'u8[3072]{0}', space=vmem, size = 0xc00, scoped, tag = 'input window, operand 5, single buffered']
    #allocation12 [shape = 's32[1]{0}', space=sflag, size = 0x4, scoped, tag = 'scoped memory for tpu_custom_call.1']
    #allocation13 [shape = 'u8[16384]{0}', space=vmem, size = 0x4000, scoped, tag = 'output window, operand 0, single buffered']
    %11 = vsyncpa [#allocation3], 0
    %12 = vsyncpa [#allocation6], 0
    %13 = vsyncpa [#allocation9], 0
    %14 = vsyncpa [#allocation12], 0
    %15 = vsyncpa [#allocation4], 0
    // Predicated region
    $region2: #{tpu_custom_call.1} parent=1 // pred_check
      _
    $region3: #{tpu_custom_call.1} parent=1 // pred_check_branch
      %17 = sbr.rel (0) target = $region5
    $region4: #{tpu_custom_call.1} parent=1 // pred_region
      %19 = vsyncadd [#allocation3], 0
      %s20 = sshll.u32 %s0, 4
      %s21 = int_to_ptr.hbm [resolvable:$true] %s20
      %s22 = sshll.u32 [#allocation2], 4
      %s23 = int_to_ptr.vmem [resolvable:$true] %s22
      %28 = dma.hbm_to_vmem [thread:$0]  %s21, 512, %s23, [#allocation3], 128, 128, 8
    $region5: #{tpu_custom_call.1} parent=1 // pred_fallthru
      _
    // Predicated region
    $region6: #{tpu_custom_call.1} parent=1 // pred_check
      _
    $region7: #{tpu_custom_call.1} parent=1 // pred_check_branch
      %30 = sbr.rel (0) target = $region9
    $region8: #{tpu_custom_call.1} parent=1 // pred_region
      %32 = vsyncadd [#allocation6], 0
      %s33 = sshll.u32 %s1, 4
      %s34 = int_to_ptr.hbm [resolvable:$true] %s33
      %s35 = sshll.u32 [#allocation5], 4
      %s36 = int_to_ptr.vmem [resolvable:$true] %s35
      %41 = dma.hbm_to_vmem [thread:$0]  %s34, 6144, %s36, [#allocation6], 128, 128, 8
    $region9: #{tpu_custom_call.1} parent=1 // pred_fallthru
      _
    // Predicated region
    $region10: #{tpu_custom_call.1} parent=1 // pred_check
      _
    $region11: #{tpu_custom_call.1} parent=1 // pred_check_branch
      %43 = sbr.rel (0) target = $region13
    $region12: #{tpu_custom_call.1} parent=1 // pred_region
      %45 = vsyncadd [#allocation6], 0
      %s46 = sshll.u32 %s2, 4
      %s47 = int_to_ptr.hbm [resolvable:$true] %s46
      %s48 = sshll.u32 [#allocation7], 4
      %s49 = int_to_ptr.vmem [resolvable:$true] %s48
      %54 = dma.hbm_to_vmem [thread:$0]  %s47, 6144, %s49, [#allocation6], 128, 128, 8
    $region13: #{tpu_custom_call.1} parent=1 // pred_fallthru
      _
    // Predicated region
    $region14: #{tpu_custom_call.1} parent=1 // pred_check
      _
    $region15: #{tpu_custom_call.1} parent=1 // pred_check_branch
      %56 = sbr.rel (0) target = $region17
    $region16: #{tpu_custom_call.1} parent=1 // pred_region
      %58 = vsyncadd [#allocation9], 0
      %s59 = sshll.u32 %s3, 4
      %s60 = int_to_ptr.hbm [resolvable:$true] %s59
      %s61 = sshll.u32 [#allocation8], 4
      %s62 = int_to_ptr.vmem [resolvable:$true] %s61
      %67 = dma.hbm_to_vmem [thread:$0]  %s60, 1024, %s62, [#allocation9], 128, 128, 8
    $region17: #{tpu_custom_call.1} parent=1 // pred_fallthru
      _
    // Predicated region
    $region18: #{tpu_custom_call.1} parent=1 // pred_check
      _
    $region19: #{tpu_custom_call.1} parent=1 // pred_check_branch
      %69 = sbr.rel (0) target = $region21
    $region20: #{tpu_custom_call.1} parent=1 // pred_region
      %71 = vsyncadd [#allocation9], 0
      %s72 = sshll.u32 %s4, 4
      %s73 = int_to_ptr.hbm [resolvable:$true] %s72
      %s74 = sshll.u32 [#allocation10], 4
      %s75 = int_to_ptr.vmem [resolvable:$true] %s74
      %80 = dma.hbm_to_vmem [thread:$0]  %s73, 2048, %s75, [#allocation9], 128, 128, 8
    $region21: #{tpu_custom_call.1} parent=1 // pred_fallthru
      _
    // Predicated region
    $region22: #{tpu_custom_call.1} parent=1 // pred_check
      _
    $region23: #{tpu_custom_call.1} parent=1 // pred_check_branch
      %82 = sbr.rel (0) target = $region25
    $region24: #{tpu_custom_call.1} parent=1 // pred_region
      %84 = vsyncadd [#allocation12], 0
      %s85 = sshll.u32 %s5, 4
      %s86 = int_to_ptr.hbm [resolvable:$true] %s85
      %s87 = sshll.u32 [#allocation11], 4
      %s88 = int_to_ptr.vmem [resolvable:$true] %s87
      %93 = dma.hbm_to_vmem [thread:$0]  %s86, 96, %s88, [#allocation12], 16, 16, 1
    $region25: #{tpu_custom_call.1} parent=1 // pred_fallthru
      _
    // Predicated region
    $region26: #{tpu_custom_call.1} parent=1 // pred_check
      _
    $region27: #{tpu_custom_call.1} parent=1 // pred_check_branch
      %95 = sbr.rel (0) target = $region29
    $region28: #{tpu_custom_call.1} parent=1 // pred_region
      %97 = dma.done [#allocation3], 512
    $region29: #{tpu_custom_call.1} parent=1 // pred_fallthru
      _
    // Predicated region
    $region30: #{tpu_custom_call.1} parent=1 // pred_check
      _
    $region31: #{tpu_custom_call.1} parent=1 // pred_check_branch
      %99 = sbr.rel (0) target = $region33
    $region32: #{tpu_custom_call.1} parent=1 // pred_region
      %101 = dma.done [#allocation6], 6144
    $region33: #{tpu_custom_call.1} parent=1 // pred_fallthru
      _
    // Predicated region
    $region34: #{tpu_custom_call.1} parent=1 // pred_check
      _
    $region35: #{tpu_custom_call.1} parent=1 // pred_check_branch
      %103 = sbr.rel (0) target = $region37
    $region36: #{tpu_custom_call.1} parent=1 // pred_region
      %105 = dma.done [#allocation6], 6144
    $region37: #{tpu_custom_call.1} parent=1 // pred_fallthru
      _
    // Predicated region
    $region38: #{tpu_custom_call.1} parent=1 // pred_check
      _
    $region39: #{tpu_custom_call.1} parent=1 // pred_check_branch
      %107 = sbr.rel (0) target = $region41
    $region40: #{tpu_custom_call.1} parent=1 // pred_region
      %109 = dma.done [#allocation9], 1024
    $region41: #{tpu_custom_call.1} parent=1 // pred_fallthru
      _
    // Predicated region
    $region42: #{tpu_custom_call.1} parent=1 // pred_check
      _
    $region43: #{tpu_custom_call.1} parent=1 // pred_check_branch
      %111 = sbr.rel (0) target = $region45
    $region44: #{tpu_custom_call.1} parent=1 // pred_region
      %113 = dma.done [#allocation9], 2048
    $region45: #{tpu_custom_call.1} parent=1 // pred_fallthru
      _
    // Predicated region
    $region46: #{tpu_custom_call.1} parent=1 // pred_check
      _
    $region47: #{tpu_custom_call.1} parent=1 // pred_check_branch
      %115 = sbr.rel (0) target = $region49
    $region48: #{tpu_custom_call.1} parent=1 // pred_region
      %117 = dma.done [#allocation12], 96
    $region49: #{tpu_custom_call.1} parent=1 // pred_fallthru
      _
    %v118 = vld [vmem:[#allocation2] sm:$0xff]
    %v119 = vld [vmem:[#allocation2 + $0x8] sm:$0xff]
    %v120 = vld [vmem:[#allocation2 + $0x10] sm:$0xff]
    %v121 = vld [vmem:[#allocation2 + $0x18] sm:$0xff]
    %v122 = vld [vmem:[#allocation10] sm:$0xff]
    %v123 = vld [vmem:[#allocation10 + $0x8] sm:$0xff]
    %v124 = vld [vmem:[#allocation10 + $0x10] sm:$0xff]
    %v125 = vld [vmem:[#allocation10 + $0x18] sm:$0xff]
    %v126 = vld [vmem:[#allocation10 + $0x20] sm:$0xff]
    %v127 = vld [vmem:[#allocation10 + $0x28] sm:$0xff]
    %v128 = vld [vmem:[#allocation10 + $0x30] sm:$0xff]
    %v129 = vld [vmem:[#allocation10 + $0x38] sm:$0xff]
    %v130 = vld [vmem:[#allocation10 + $0x40] sm:$0xff]
    %v131 = vld [vmem:[#allocation10 + $0x48] sm:$0xff]
    %v132 = vld [vmem:[#allocation10 + $0x50] sm:$0xff]
    %v133 = vld [vmem:[#allocation10 + $0x58] sm:$0xff]
    %v134 = vld [vmem:[#allocation10 + $0x60] sm:$0xff]
    %v135 = vld [vmem:[#allocation10 + $0x68] sm:$0xff]
    %v136 = vld [vmem:[#allocation10 + $0x70] sm:$0xff]
    %v137 = vld [vmem:[#allocation10 + $0x78] sm:$0xff]
    %v138 = vld [vmem:[#allocation8] sm:$0xff]
    %v139 = vld [vmem:[#allocation8 + $0x8] sm:$0xff]
    %v140 = vld [vmem:[#allocation8 + $0x10] sm:$0xff]
    %v141 = vld [vmem:[#allocation8 + $0x18] sm:$0xff]
    %s142 = scalar_lea.vmem [#allocation8], 32
    %v143 = vld [vmem:[%s142] sm:$0xff]
    %v144 = vld [vmem:[%s142 + $0x8] sm:$0xff]
    %v145 = vld [vmem:[%s142 + $0x10] sm:$0xff]
    %v146 = vld [vmem:[%s142 + $0x18] sm:$0xff]
    %v147 = vld [vmem:[#allocation11] sm:$0x1]
    %vm148 = vcmask 261120
    %v150 = vsel %vm148, %v138, 0
    %v153 = vsel %vm148, %v139, 0
    %v156 = vsel %vm148, %v140, 0
    %v159 = vsel %vm148, %v141, 0
    %161 = vmatpush.msra.mxu0 0.0
    %162 = vmatpush.msra.mxu0 0.0
    %163 = vmatpush.msra.mxu0 0.0
    %164 = vmatpush.msra.mxu0 0.0
    %165 = vmatpush.msra.mxu0 0.0
    %166 = vmatpush.msra.mxu0 0.0
    %167 = vmatpush.msra.mxu0 0.0
    %168 = vmatpush.msra.mxu0 0.0
    %169 = vmatpush.msra.mxu0 0.0
    %170 = vmatpush.msra.mxu0 0.0
    %171 = vmatpush.msra.mxu0 0.0
    %172 = vmatpush.msra.mxu0 0.0
    %173 = vmatpush.msra.mxu0 %v121
    %174 = vmatpush.msra.mxu0 %v120
    %175 = vmatpush.msra.mxu0 %v119
    %176 = vmatpush.msra.mxu0 %v118
    %177 = vmatmul.f32.gmra.mxu0 %v150
    %v178 = vpop.f32.mrf.mxu0
    %v179 = vadd.f32 0.0, %v178
    %180 = vmatmul.f32.gmra.mxu0 %v153
    %v181 = vpop.f32.mrf.mxu0
    %v182 = vadd.f32 0.0, %v181
    %183 = vmatmul.f32.gmra.mxu0 %v156
    %v184 = vpop.f32.mrf.mxu0
    %v185 = vadd.f32 0.0, %v184
    %186 = vmatmul.f32.gmra.mxu0 %v159
    %v187 = vpop.f32.mrf.mxu0
    %v188 = vadd.f32 0.0, %v187
    %189 = vdwg.mxu0
    %v191 = vsel %vm148, %v143, 0
    %v194 = vsel %vm148, %v144, 0
    %v197 = vsel %vm148, %v145, 0
    %v200 = vsel %vm148, %v146, 0
    %202 = vmatpush.msra.mxu0 0.0
    %203 = vmatpush.msra.mxu0 0.0
    %204 = vmatpush.msra.mxu0 0.0
    %205 = vmatpush.msra.mxu0 0.0
    %206 = vmatpush.msra.mxu0 0.0
    %207 = vmatpush.msra.mxu0 0.0
    %208 = vmatpush.msra.mxu0 0.0
    %209 = vmatpush.msra.mxu0 0.0
    %210 = vmatpush.msra.mxu0 0.0
    %211 = vmatpush.msra.mxu0 0.0
    %212 = vmatpush.msra.mxu0 0.0
    %213 = vmatpush.msra.mxu0 0.0
    %214 = vmatpush.msra.mxu0 %v121
    %215 = vmatpush.msra.mxu0 %v120
    %216 = vmatpush.msra.mxu0 %v119
    %217 = vmatpush.msra.mxu0 %v118
    %218 = vmatmul.f32.gmra.mxu0 %v191
    %v219 = vpop.f32.mrf.mxu0
    %v220 = vadd.f32 0.0, %v219
    %221 = vmatmul.f32.gmra.mxu0 %v194
    %v222 = vpop.f32.mrf.mxu0
    %v223 = vadd.f32 0.0, %v222
    %224 = vmatmul.f32.gmra.mxu0 %v197
    %v225 = vpop.f32.mrf.mxu0
    %v226 = vadd.f32 0.0, %v225
    %227 = vmatmul.f32.gmra.mxu0 %v200
    %v228 = vpop.f32.mrf.mxu0
    %v229 = vadd.f32 0.0, %v228
    %230 = vdwg.mxu0
    %v231 = vld [vmem:[#allocation5] sm:$0xff]
    %v232 = vld [vmem:[#allocation5 + $0x8] sm:$0xff]
    %v233 = vld [vmem:[#allocation5 + $0x10] sm:$0xff]
    %v234 = vld [vmem:[#allocation5 + $0x18] sm:$0xff]
    %v235 = vld [vmem:[#allocation5 + $0x20] sm:$0xff]
    %v236 = vld [vmem:[#allocation5 + $0x28] sm:$0xff]
    %v237 = vld [vmem:[#allocation5 + $0x30] sm:$0xff]
    %v238 = vld [vmem:[#allocation5 + $0x38] sm:$0xff]
    %v239 = vld [vmem:[#allocation5 + $0x40] sm:$0xff]
    %v240 = vld [vmem:[#allocation5 + $0x48] sm:$0xff]
    %v241 = vld [vmem:[#allocation5 + $0x50] sm:$0xff]
    %v242 = vld [vmem:[#allocation5 + $0x58] sm:$0xff]
    %v243 = vld [vmem:[#allocation5 + $0x60] sm:$0xff]
    %v244 = vld [vmem:[#allocation5 + $0x68] sm:$0xff]
    %v245 = vld [vmem:[#allocation5 + $0x70] sm:$0xff]
    %v246 = vld [vmem:[#allocation5 + $0x78] sm:$0xff]
    %s247 = scalar_lea.vmem [#allocation5], 128
    %v248 = vld [vmem:[%s247] sm:$0xff]
    %v249 = vld [vmem:[%s247 + $0x8] sm:$0xff]
    %v250 = vld [vmem:[%s247 + $0x10] sm:$0xff]
    %v251 = vld [vmem:[%s247 + $0x18] sm:$0xff]
    %v252 = vld [vmem:[%s247 + $0x20] sm:$0xff]
    %v253 = vld [vmem:[%s247 + $0x28] sm:$0xff]
    %v254 = vld [vmem:[%s247 + $0x30] sm:$0xff]
    %v255 = vld [vmem:[%s247 + $0x38] sm:$0xff]
    %v256 = vld [vmem:[%s247 + $0x40] sm:$0xff]
    %v257 = vld [vmem:[%s247 + $0x48] sm:$0xff]
    %v258 = vld [vmem:[%s247 + $0x50] sm:$0xff]
    %v259 = vld [vmem:[%s247 + $0x58] sm:$0xff]
    %v260 = vld [vmem:[%s247 + $0x60] sm:$0xff]
    %v261 = vld [vmem:[%s247 + $0x68] sm:$0xff]
    %v262 = vld [vmem:[%s247 + $0x70] sm:$0xff]
    %v263 = vld [vmem:[%s247 + $0x78] sm:$0xff]
    %264 = vmatpush.msra.mxu0 %v263
    %265 = vmatpush.msra.mxu0 %v262
    %266 = vmatpush.msra.mxu0 %v261
    %267 = vmatpush.msra.mxu0 %v260
    %268 = vmatpush.msra.mxu0 %v259
    %269 = vmatpush.msra.mxu0 %v258
    %270 = vmatpush.msra.mxu0 %v257
    %271 = vmatpush.msra.mxu0 %v256
    %272 = vmatpush.msra.mxu0 %v255
    %273 = vmatpush.msra.mxu0 %v254
    %274 = vmatpush.msra.mxu0 %v253
    %275 = vmatpush.msra.mxu0 %v252
    %276 = vmatpush.msra.mxu0 %v251
    %277 = vmatpush.msra.mxu0 %v250
    %278 = vmatpush.msra.mxu0 %v249
    %279 = vmatpush.msra.mxu0 %v248
    %280 = vmatmul.f32.gmra.mxu0 %v118
    %v281 = vpop.f32.mrf.mxu0
    %v282 = vadd.f32 0.0, %v281
    %283 = vmatmul.f32.gmra.mxu0 %v119
    %v284 = vpop.f32.mrf.mxu0
    %v285 = vadd.f32 0.0, %v284
    %286 = vmatmul.f32.gmra.mxu0 %v120
    %v287 = vpop.f32.mrf.mxu0
    %v288 = vadd.f32 0.0, %v287
    %289 = vmatmul.f32.gmra.mxu0 %v121
    %v290 = vpop.f32.mrf.mxu0
    %v291 = vadd.f32 0.0, %v290
    %292 = vdwg.mxu0
    %293 = vmatpush.msra.mxu0 %v246
    %294 = vmatpush.msra.mxu0 %v245
    %295 = vmatpush.msra.mxu0 %v244
    %296 = vmatpush.msra.mxu0 %v243
    %297 = vmatpush.msra.mxu0 %v242
    %298 = vmatpush.msra.mxu0 %v241
    %299 = vmatpush.msra.mxu0 %v240
    %300 = vmatpush.msra.mxu0 %v239
    %301 = vmatpush.msra.mxu0 %v238
    %302 = vmatpush.msra.mxu0 %v237
    %303 = vmatpush.msra.mxu0 %v236
    %304 = vmatpush.msra.mxu0 %v235
    %305 = vmatpush.msra.mxu0 %v234
    %306 = vmatpush.msra.mxu0 %v233
    %307 = vmatpush.msra.mxu0 %v232
    %308 = vmatpush.msra.mxu0 %v231
    %309 = vmatmul.f32.gmra.mxu0 %v179
    %v310 = vpop.f32.mrf.mxu0
    %v311 = vadd.f32 %v282, %v310
    %312 = vmatmul.f32.gmra.mxu0 %v182
    %v313 = vpop.f32.mrf.mxu0
    %v314 = vadd.f32 %v285, %v313
    %315 = vmatmul.f32.gmra.mxu0 %v185
    %v316 = vpop.f32.mrf.mxu0
    %v317 = vadd.f32 %v288, %v316
    %318 = vmatmul.f32.gmra.mxu0 %v188
    %v319 = vpop.f32.mrf.mxu0
    %v320 = vadd.f32 %v291, %v319
    %321 = vdwg.mxu0
    %s322 = scalar_lea.vmem [#allocation5], 256
    %v323 = vld [vmem:[%s322] sm:$0xff]
    %v324 = vld [vmem:[%s322 + $0x8] sm:$0xff]
    %v325 = vld [vmem:[%s322 + $0x10] sm:$0xff]
    %v326 = vld [vmem:[%s322 + $0x18] sm:$0xff]
    %v327 = vld [vmem:[%s322 + $0x20] sm:$0xff]
    %v328 = vld [vmem:[%s322 + $0x28] sm:$0xff]
    %v329 = vld [vmem:[%s322 + $0x30] sm:$0xff]
    %v330 = vld [vmem:[%s322 + $0x38] sm:$0xff]
    %v331 = vld [vmem:[%s322 + $0x40] sm:$0xff]
    %v332 = vld [vmem:[%s322 + $0x48] sm:$0xff]
    %v333 = vld [vmem:[%s322 + $0x50] sm:$0xff]
    %v334 = vld [vmem:[%s322 + $0x58] sm:$0xff]
    %v335 = vld [vmem:[%s322 + $0x60] sm:$0xff]
    %v336 = vld [vmem:[%s322 + $0x68] sm:$0xff]
    %v337 = vld [vmem:[%s322 + $0x70] sm:$0xff]
    %v338 = vld [vmem:[%s322 + $0x78] sm:$0xff]
    %339 = vmatpush.msra.mxu0 %v338
    %340 = vmatpush.msra.mxu0 %v337
    %341 = vmatpush.msra.mxu0 %v336
    %342 = vmatpush.msra.mxu0 %v335
    %343 = vmatpush.msra.mxu0 %v334
    %344 = vmatpush.msra.mxu0 %v333
    %345 = vmatpush.msra.mxu0 %v332
    %346 = vmatpush.msra.mxu0 %v331
    %347 = vmatpush.msra.mxu0 %v330
    %348 = vmatpush.msra.mxu0 %v329
    %349 = vmatpush.msra.mxu0 %v328
    %350 = vmatpush.msra.mxu0 %v327
    %351 = vmatpush.msra.mxu0 %v326
    %352 = vmatpush.msra.mxu0 %v325
    %353 = vmatpush.msra.mxu0 %v324
    %354 = vmatpush.msra.mxu0 %v323
    %355 = vmatmul.f32.gmra.mxu0 %v220
    %v356 = vpop.f32.mrf.mxu0
    %v357 = vadd.f32 0.0, %v356
    %358 = vmatmul.f32.gmra.mxu0 %v223
    %v359 = vpop.f32.mrf.mxu0
    %v360 = vadd.f32 0.0, %v359
    %361 = vmatmul.f32.gmra.mxu0 %v226
    %v362 = vpop.f32.mrf.mxu0
    %v363 = vadd.f32 0.0, %v362
    %364 = vmatmul.f32.gmra.mxu0 %v229
    %v365 = vpop.f32.mrf.mxu0
    %v366 = vadd.f32 0.0, %v365
    %367 = vdwg.mxu0
    %v368 = vadd.f32 %v311, %v357
    %v369 = vadd.f32 %v314, %v360
    %v370 = vadd.f32 %v317, %v363
    %v371 = vadd.f32 %v320, %v366
    %v373 = vperm.slane %v147, 0
    %v375 = vadd.f32 %v368, %v373
    %v376 = vadd.f32 %v369, %v373
    %v377 = vadd.f32 %v370, %v373
    %v378 = vadd.f32 %v371, %v373
    %s379 = scalar_lea.vmem [#allocation11], 1
    %v380 = vld [vmem:[%s379] sm:$0x1]
    %s381 = scalar_lea.vmem [#allocation11], 2
    %v382 = vld [vmem:[%s381] sm:$0x1]
    %v383 = vadd.f32 %v375, %v376
    %v384 = vadd.f32 %v383, %v377
    %v385 = vadd.f32 %v384, %v378
    %v386 = vrot.slane %v385, 4
    %v387 = vadd.f32 %v385, %v386
    %v388 = vrot.slane %v387, 2
    %v389 = vadd.f32 %v387, %v388
    %v390 = vrot.slane %v389, 1
    %v391 = vadd.f32 %v389, %v390
    %v392 = vmul.f32 %v375, %v375
    %v393 = vmul.f32 %v376, %v376
    %v394 = vmul.f32 %v377, %v377
    %v395 = vmul.f32 %v378, %v378
    %v396 = vadd.f32 %v392, %v393
    %v397 = vadd.f32 %v396, %v394
    %v398 = vadd.f32 %v397, %v395
    %v399 = vrot.slane %v398, 4
    %v400 = vadd.f32 %v398, %v399
    %v401 = vrot.slane %v400, 2
    %v402 = vadd.f32 %v400, %v401
    %v403 = vrot.slane %v402, 1
    %v404 = vadd.f32 %v402, %v403
    %vm405 = vcmask 1040384
    %v406 = vsel %vm405, %v391, %v404
    %407 = vmatpush.msra.mxu0 %v137
    %408 = vmatpush.msra.mxu0 %v136
    %409 = vmatpush.msra.mxu0 %v135
    %410 = vmatpush.msra.mxu0 %v134
    %411 = vmatpush.msra.mxu0 %v133
    %412 = vmatpush.msra.mxu0 %v132
    %413 = vmatpush.msra.mxu0 %v131
    %414 = vmatpush.msra.mxu0 %v130
    %415 = vmatpush.msra.mxu0 %v129
    %416 = vmatpush.msra.mxu0 %v128
    %417 = vmatpush.msra.mxu0 %v127
    %418 = vmatpush.msra.mxu0 %v126
    %419 = vmatpush.msra.mxu0 %v125
    %420 = vmatpush.msra.mxu0 %v124
    %421 = vmatpush.msra.mxu0 %v123
    %422 = vmatpush.msra.mxu0 %v122
    %423 = vmatmul.f32.gmra.mxu0 %v406
    %v424 = vpop.f32.mrf.mxu0
    %v425 = vadd.f32 0.0, %v424
    %426 = vdwg.mxu0
    %v427 = vmul.f32 %v425, 0.001953125
    %v428 = vmul.f32 %v427, %v427
    %v430 = vrot.slane %v428, 7
    %v432 = vsub.f32 %v427, %v430
    %v433 = vperm.slane %v427, 0
    %v434 = vsub.f32 %v375, %v433
    %v435 = vsub.f32 %v376, %v433
    %v436 = vsub.f32 %v377, %v433
    %v437 = vsub.f32 %v378, %v433
    %v438 = vadd.f32 %v432, 1e-05
    %v439 = vrsqrt.pop %v438
    %v440 = vmul.f32 %v439, %v438
    %v441 = vmul.f32 %v440, %v439
    %v442 = vmul.f32 0.5, %v441
    %v443 = vsub.f32 1.5, %v442
    %v444 = vmul.f32 %v439, %v443
    %vm445 = vweird.f32 %v438
    %vm446 = vweird.f32 %v439
    %vm447 = vmor %vm445, %vm446
    %v448 = vsel %vm447, %v439, %v444
    %v449 = vperm.slane %v448, 1
    %v450 = vmul.f32 %v434, %v449
    %v451 = vmul.f32 %v435, %v449
    %v452 = vmul.f32 %v436, %v449
    %v453 = vmul.f32 %v437, %v449
    %v455 = vperm.slane %v380, 0
    %v457 = vmul.f32 %v450, %v455
    %v458 = vmul.f32 %v451, %v455
    %v459 = vmul.f32 %v452, %v455
    %v460 = vmul.f32 %v453, %v455
    %v462 = vperm.slane %v382, 0
    %v464 = vadd.f32 %v457, %v462
    %v465 = vadd.f32 %v458, %v462
    %v466 = vadd.f32 %v459, %v462
    %v467 = vadd.f32 %v460, %v462
    %v468 = vmax.f32 %v464, 0.0
    %v469 = vmax.f32 %v465, 0.0
    %v470 = vmax.f32 %v466, 0.0
    %v471 = vmax.f32 %v467, 0.0
    %s472 = scalar_lea.vmem [#allocation11], 3
    %v473 = vld [vmem:[%s472] sm:$0x1]
    %474 = vmatpush.msra.mxu0 0.0
    %475 = vmatpush.msra.mxu0 0.0
    %476 = vmatpush.msra.mxu0 0.0
    %477 = vmatpush.msra.mxu0 0.0
    %478 = vmatpush.msra.mxu0 0.0
    %479 = vmatpush.msra.mxu0 0.0
    %480 = vmatpush.msra.mxu0 0.0
    %481 = vmatpush.msra.mxu0 0.0
    %482 = vmatpush.msra.mxu0 0.0
    %483 = vmatpush.msra.mxu0 0.0
    %484 = vmatpush.msra.mxu0 0.0
    %485 = vmatpush.msra.mxu0 0.0
    %486 = vmatpush.msra.mxu0 %v471
    %487 = vmatpush.msra.mxu0 %v470
    %488 = vmatpush.msra.mxu0 %v469
    %489 = vmatpush.msra.mxu0 %v468
    %490 = vmatmul.f32.gmra.mxu0 %v150
    %v491 = vpop.f32.mrf.mxu0
    %v492 = vadd.f32 0.0, %v491
    %493 = vmatmul.f32.gmra.mxu0 %v153
    %v494 = vpop.f32.mrf.mxu0
    %v495 = vadd.f32 0.0, %v494
    %496 = vmatmul.f32.gmra.mxu0 %v156
    %v497 = vpop.f32.mrf.mxu0
    %v498 = vadd.f32 0.0, %v497
    %499 = vmatmul.f32.gmra.mxu0 %v159
    %v500 = vpop.f32.mrf.mxu0
    %v501 = vadd.f32 0.0, %v500
    %502 = vdwg.mxu0
    %503 = vmatpush.msra.mxu0 0.0
    %504 = vmatpush.msra.mxu0 0.0
    %505 = vmatpush.msra.mxu0 0.0
    %506 = vmatpush.msra.mxu0 0.0
    %507 = vmatpush.msra.mxu0 0.0
    %508 = vmatpush.msra.mxu0 0.0
    %509 = vmatpush.msra.mxu0 0.0
    %510 = vmatpush.msra.mxu0 0.0
    %511 = vmatpush.msra.mxu0 0.0
    %512 = vmatpush.msra.mxu0 0.0
    %513 = vmatpush.msra.mxu0 0.0
    %514 = vmatpush.msra.mxu0 0.0
    %515 = vmatpush.msra.mxu0 %v471
    %516 = vmatpush.msra.mxu0 %v470
    %517 = vmatpush.msra.mxu0 %v469
    %518 = vmatpush.msra.mxu0 %v468
    %519 = vmatmul.f32.gmra.mxu0 %v191
    %v520 = vpop.f32.mrf.mxu0
    %v521 = vadd.f32 0.0, %v520
    %522 = vmatmul.f32.gmra.mxu0 %v194
    %v523 = vpop.f32.mrf.mxu0
    %v524 = vadd.f32 0.0, %v523
    %525 = vmatmul.f32.gmra.mxu0 %v197
    %v526 = vpop.f32.mrf.mxu0
    %v527 = vadd.f32 0.0, %v526
    %528 = vmatmul.f32.gmra.mxu0 %v200
    %v529 = vpop.f32.mrf.mxu0
    %v530 = vadd.f32 0.0, %v529
    %531 = vdwg.mxu0
    %v532 = vld [vmem:[#allocation7] sm:$0xff]
    %v533 = vld [vmem:[#allocation7 + $0x8] sm:$0xff]
    %v534 = vld [vmem:[#allocation7 + $0x10] sm:$0xff]
    %v535 = vld [vmem:[#allocation7 + $0x18] sm:$0xff]
    %v536 = vld [vmem:[#allocation7 + $0x20] sm:$0xff]
    %v537 = vld [vmem:[#allocation7 + $0x28] sm:$0xff]
    %v538 = vld [vmem:[#allocation7 + $0x30] sm:$0xff]
    %v539 = vld [vmem:[#allocation7 + $0x38] sm:$0xff]
    %v540 = vld [vmem:[#allocation7 + $0x40] sm:$0xff]
    %v541 = vld [vmem:[#allocation7 + $0x48] sm:$0xff]
    %v542 = vld [vmem:[#allocation7 + $0x50] sm:$0xff]
    %v543 = vld [vmem:[#allocation7 + $0x58] sm:$0xff]
    %v544 = vld [vmem:[#allocation7 + $0x60] sm:$0xff]
    %v545 = vld [vmem:[#allocation7 + $0x68] sm:$0xff]
    %v546 = vld [vmem:[#allocation7 + $0x70] sm:$0xff]
    %v547 = vld [vmem:[#allocation7 + $0x78] sm:$0xff]
    %s548 = scalar_lea.vmem [#allocation7], 128
    %v549 = vld [vmem:[%s548] sm:$0xff]
    %v550 = vld [vmem:[%s548 + $0x8] sm:$0xff]
    %v551 = vld [vmem:[%s548 + $0x10] sm:$0xff]
    %v552 = vld [vmem:[%s548 + $0x18] sm:$0xff]
    %v553 = vld [vmem:[%s548 + $0x20] sm:$0xff]
    %v554 = vld [vmem:[%s548 + $0x28] sm:$0xff]
    %v555 = vld [vmem:[%s548 + $0x30] sm:$0xff]
    %v556 = vld [vmem:[%s548 + $0x38] sm:$0xff]
    %v557 = vld [vmem:[%s548 + $0x40] sm:$0xff]
    %v558 = vld [vmem:[%s548 + $0x48] sm:$0xff]
    %v559 = vld [vmem:[%s548 + $0x50] sm:$0xff]
    %v560 = vld [vmem:[%s548 + $0x58] sm:$0xff]
    %v561 = vld [vmem:[%s548 + $0x60] sm:$0xff]
    %v562 = vld [vmem:[%s548 + $0x68] sm:$0xff]
    %v563 = vld [vmem:[%s548 + $0x70] sm:$0xff]
    %v564 = vld [vmem:[%s548 + $0x78] sm:$0xff]
    %565 = vmatpush.msra.mxu0 %v564
    %566 = vmatpush.msra.mxu0 %v563
    %567 = vmatpush.msra.mxu0 %v562
    %568 = vmatpush.msra.mxu0 %v561
    %569 = vmatpush.msra.mxu0 %v560
    %570 = vmatpush.msra.mxu0 %v559
    %571 = vmatpush.msra.mxu0 %v558
    %572 = vmatpush.msra.mxu0 %v557
    %573 = vmatpush.msra.mxu0 %v556
    %574 = vmatpush.msra.mxu0 %v555
    %575 = vmatpush.msra.mxu0 %v554
    %576 = vmatpush.msra.mxu0 %v553
    %577 = vmatpush.msra.mxu0 %v552
    %578 = vmatpush.msra.mxu0 %v551
    %579 = vmatpush.msra.mxu0 %v550
    %580 = vmatpush.msra.mxu0 %v549
    %581 = vmatmul.f32.gmra.mxu0 %v468
    %v582 = vpop.f32.mrf.mxu0
    %v583 = vadd.f32 0.0, %v582
    %584 = vmatmul.f32.gmra.mxu0 %v469
    %v585 = vpop.f32.mrf.mxu0
    %v586 = vadd.f32 0.0, %v585
    %587 = vmatmul.f32.gmra.mxu0 %v470
    %v588 = vpop.f32.mrf.mxu0
    %v589 = vadd.f32 0.0, %v588
    %590 = vmatmul.f32.gmra.mxu0 %v471
    %v591 = vpop.f32.mrf.mxu0
    %v592 = vadd.f32 0.0, %v591
    %593 = vdwg.mxu0
    %594 = vmatpush.msra.mxu0 %v547
    %595 = vmatpush.msra.mxu0 %v546
    %596 = vmatpush.msra.mxu0 %v545
    %597 = vmatpush.msra.mxu0 %v544
    %598 = vmatpush.msra.mxu0 %v543
    %599 = vmatpush.msra.mxu0 %v542
    %600 = vmatpush.msra.mxu0 %v541
    %601 = vmatpush.msra.mxu0 %v540
    %602 = vmatpush.msra.mxu0 %v539
    %603 = vmatpush.msra.mxu0 %v538
    %604 = vmatpush.msra.mxu0 %v537
    %605 = vmatpush.msra.mxu0 %v536
    %606 = vmatpush.msra.mxu0 %v535
    %607 = vmatpush.msra.mxu0 %v534
    %608 = vmatpush.msra.mxu0 %v533
    %609 = vmatpush.msra.mxu0 %v532
    %610 = vmatmul.f32.gmra.mxu0 %v492
    %v611 = vpop.f32.mrf.mxu0
    %v612 = vadd.f32 %v583, %v611
    %613 = vmatmul.f32.gmra.mxu0 %v495
    %v614 = vpop.f32.mrf.mxu0
    %v615 = vadd.f32 %v586, %v614
    %616 = vmatmul.f32.gmra.mxu0 %v498
    %v617 = vpop.f32.mrf.mxu0
    %v618 = vadd.f32 %v589, %v617
    %619 = vmatmul.f32.gmra.mxu0 %v501
    %v620 = vpop.f32.mrf.mxu0
    %v621 = vadd.f32 %v592, %v620
    %622 = vdwg.mxu0
    %s623 = scalar_lea.vmem [#allocation7], 256
    %v624 = vld [vmem:[%s623] sm:$0xff]
    %v625 = vld [vmem:[%s623 + $0x8] sm:$0xff]
    %v626 = vld [vmem:[%s623 + $0x10] sm:$0xff]
    %v627 = vld [vmem:[%s623 + $0x18] sm:$0xff]
    %v628 = vld [vmem:[%s623 + $0x20] sm:$0xff]
    %v629 = vld [vmem:[%s623 + $0x28] sm:$0xff]
    %v630 = vld [vmem:[%s623 + $0x30] sm:$0xff]
    %v631 = vld [vmem:[%s623 + $0x38] sm:$0xff]
    %v632 = vld [vmem:[%s623 + $0x40] sm:$0xff]
    %v633 = vld [vmem:[%s623 + $0x48] sm:$0xff]
    %v634 = vld [vmem:[%s623 + $0x50] sm:$0xff]
    %v635 = vld [vmem:[%s623 + $0x58] sm:$0xff]
    %v636 = vld [vmem:[%s623 + $0x60] sm:$0xff]
    %v637 = vld [vmem:[%s623 + $0x68] sm:$0xff]
    %v638 = vld [vmem:[%s623 + $0x70] sm:$0xff]
    %v639 = vld [vmem:[%s623 + $0x78] sm:$0xff]
    %640 = vmatpush.msra.mxu0 %v639
    %641 = vmatpush.msra.mxu0 %v638
    %642 = vmatpush.msra.mxu0 %v637
    %643 = vmatpush.msra.mxu0 %v636
    %644 = vmatpush.msra.mxu0 %v635
    %645 = vmatpush.msra.mxu0 %v634
    %646 = vmatpush.msra.mxu0 %v633
    %647 = vmatpush.msra.mxu0 %v632
    %648 = vmatpush.msra.mxu0 %v631
    %649 = vmatpush.msra.mxu0 %v630
    %650 = vmatpush.msra.mxu0 %v629
    %651 = vmatpush.msra.mxu0 %v628
    %652 = vmatpush.msra.mxu0 %v627
    %653 = vmatpush.msra.mxu0 %v626
    %654 = vmatpush.msra.mxu0 %v625
    %655 = vmatpush.msra.mxu0 %v624
    %656 = vmatmul.f32.gmra.mxu0 %v521
    %v657 = vpop.f32.mrf.mxu0
    %v658 = vadd.f32 0.0, %v657
    %659 = vmatmul.f32.gmra.mxu0 %v524
    %v660 = vpop.f32.mrf.mxu0
    %v661 = vadd.f32 0.0, %v660
    %662 = vmatmul.f32.gmra.mxu0 %v527
    %v663 = vpop.f32.mrf.mxu0
    %v664 = vadd.f32 0.0, %v663
    %665 = vmatmul.f32.gmra.mxu0 %v530
    %v666 = vpop.f32.mrf.mxu0
    %v667 = vadd.f32 0.0, %v666
    %668 = vdwg.mxu0
    %v669 = vadd.f32 %v612, %v658
    %v670 = vadd.f32 %v615, %v661
    %v671 = vadd.f32 %v618, %v664
    %v672 = vadd.f32 %v621, %v667
    %v674 = vperm.slane %v473, 0
    %v676 = vadd.f32 %v669, %v674
    %v677 = vadd.f32 %v670, %v674
    %v678 = vadd.f32 %v671, %v674
    %v679 = vadd.f32 %v672, %v674
    %s680 = scalar_lea.vmem [#allocation11], 4
    %v681 = vld [vmem:[%s680] sm:$0x1]
    %s682 = scalar_lea.vmem [#allocation11], 5
    %v683 = vld [vmem:[%s682] sm:$0x1]
    %v684 = vadd.f32 %v676, %v677
    %v685 = vadd.f32 %v684, %v678
    %v686 = vadd.f32 %v685, %v679
    %v687 = vrot.slane %v686, 4
    %v688 = vadd.f32 %v686, %v687
    %v689 = vrot.slane %v688, 2
    %v690 = vadd.f32 %v688, %v689
    %v691 = vrot.slane %v690, 1
    %v692 = vadd.f32 %v690, %v691
    %v693 = vmul.f32 %v676, %v676
    %v694 = vmul.f32 %v677, %v677
    %v695 = vmul.f32 %v678, %v678
    %v696 = vmul.f32 %v679, %v679
    %v697 = vadd.f32 %v693, %v694
    %v698 = vadd.f32 %v697, %v695
    %v699 = vadd.f32 %v698, %v696
    %v700 = vrot.slane %v699, 4
    %v701 = vadd.f32 %v699, %v700
    %v702 = vrot.slane %v701, 2
    %v703 = vadd.f32 %v701, %v702
    %v704 = vrot.slane %v703, 1
    %v705 = vadd.f32 %v703, %v704
    %v706 = vsel %vm405, %v692, %v705
    %707 = vmatpush.msra.mxu0 %v137
    %708 = vmatpush.msra.mxu0 %v136
    %709 = vmatpush.msra.mxu0 %v135
    %710 = vmatpush.msra.mxu0 %v134
    %711 = vmatpush.msra.mxu0 %v133
    %712 = vmatpush.msra.mxu0 %v132
    %713 = vmatpush.msra.mxu0 %v131
    %714 = vmatpush.msra.mxu0 %v130
    %715 = vmatpush.msra.mxu0 %v129
    %716 = vmatpush.msra.mxu0 %v128
    %717 = vmatpush.msra.mxu0 %v127
    %718 = vmatpush.msra.mxu0 %v126
    %719 = vmatpush.msra.mxu0 %v125
    %720 = vmatpush.msra.mxu0 %v124
    %721 = vmatpush.msra.mxu0 %v123
    %722 = vmatpush.msra.mxu0 %v122
    %723 = vmatmul.f32.gmra.mxu0 %v706
    %v724 = vpop.f32.mrf.mxu0
    %v725 = vadd.f32 0.0, %v724
    %726 = vdwg.mxu0
    %v727 = vmul.f32 %v725, 0.001953125
    %v728 = vmul.f32 %v727, %v727
    %v730 = vrot.slane %v728, 7
    %v732 = vsub.f32 %v727, %v730
    %v733 = vperm.slane %v727, 0
    %v734 = vsub.f32 %v676, %v733
    %v735 = vsub.f32 %v677, %v733
    %v736 = vsub.f32 %v678, %v733
    %v737 = vsub.f32 %v679, %v733
    %v738 = vadd.f32 %v732, 1e-05
    %v739 = vrsqrt.pop %v738
    %v740 = vmul.f32 %v739, %v738
    %v741 = vmul.f32 %v740, %v739
    %v742 = vmul.f32 0.5, %v741
    %v743 = vsub.f32 1.5, %v742
    %v744 = vmul.f32 %v739, %v743
    %vm745 = vweird.f32 %v738
    %vm746 = vweird.f32 %v739
    %vm747 = vmor %vm745, %vm746
    %v748 = vsel %vm747, %v739, %v744
    %v749 = vperm.slane %v748, 1
    %v750 = vmul.f32 %v734, %v749
    %v751 = vmul.f32 %v735, %v749
    %v752 = vmul.f32 %v736, %v749
    %v753 = vmul.f32 %v737, %v749
    %v755 = vperm.slane %v681, 0
    %v757 = vmul.f32 %v750, %v755
    %v758 = vmul.f32 %v751, %v755
    %v759 = vmul.f32 %v752, %v755
    %v760 = vmul.f32 %v753, %v755
    %v762 = vperm.slane %v683, 0
    %v764 = vadd.f32 %v757, %v762
    %v765 = vadd.f32 %v758, %v762
    %v766 = vadd.f32 %v759, %v762
    %v767 = vadd.f32 %v760, %v762
    %v768 = vadd.f32 %v764, %v118
    %v769 = vadd.f32 %v765, %v119
    %v770 = vadd.f32 %v766, %v120
    %v771 = vadd.f32 %v767, %v121
    %v772 = vmax.f32 %v768, 0.0
    %v773 = vmax.f32 %v769, 0.0
    %v774 = vmax.f32 %v770, 0.0
    %v775 = vmax.f32 %v771, 0.0
    %776 = vst [vmem:[#allocation13] sm:$0xff] %v772
    %777 = vst [vmem:[#allocation13 + $0x8] sm:$0xff] %v773
    %778 = vst [vmem:[#allocation13 + $0x10] sm:$0xff] %v774
    %779 = vst [vmem:[#allocation13 + $0x18] sm:$0xff] %v775
    // Predicated region
    $region50: #{tpu_custom_call.1} parent=1 // pred_check
      _
    $region51: #{tpu_custom_call.1} parent=1 // pred_check_branch
      %781 = sbr.rel (0) target = $region53
    $region52: #{tpu_custom_call.1} parent=1 // pred_region
      %783 = vsyncadd [#allocation4], 0
      %s784 = sshll.u32 [#allocation13], 4
      %s785 = int_to_ptr.vmem [resolvable:$true] %s784
      %s786 = sshll.u32 %s6, 4
      %s787 = int_to_ptr.hbm [resolvable:$true] %s786
      %792 = dma.vmem_to_hbm [thread:$0]  %s785, 512, %s787, [#allocation4], 128, 128, 8
    $region53: #{tpu_custom_call.1} parent=1 // pred_fallthru
      _
    // Predicated region
    $region54: #{tpu_custom_call.1} parent=1 // pred_check
      _
    $region55: #{tpu_custom_call.1} parent=1 // pred_check_branch
      %794 = sbr.rel (0) target = $region57
    $region56: #{tpu_custom_call.1} parent=1 // pred_region
      %796 = dma.done [#allocation4], 512
    $region57: #{tpu_custom_call.1} parent=1 // pred_fallthru
      _
    %797 = vsyncpa [#allocation3], 1
    %798 = vsyncpa [#allocation6], 1
    %799 = vsyncpa [#allocation9], 1
    %800 = vsyncpa [#allocation12], 1
    %801 = vsyncpa [#allocation4], 1

</llo_original>
